<compile_context>
chip_gen: v7x
topology: tpu7x:2x2x1
jax: 0.10.0
libtpu: 0.0.40
codegen_flags: <defaults>
</compile_context>

<pallas_src>
import math

import jax
import jax.numpy as jnp
from jax import lax
from jax.experimental import pallas as pl
from jax.experimental.pallas import tpu as pltpu


def _cqa_kernel(q_ref, colid_ref, c_ref, cm_ref, rowid_ref, o_ref):
    # q_ref    : [bbv, D]    packed (un-normalized) query block, original dtype
    # colid_ref: [1, bbv]    int32 local batch id per packed query column, -1 where masked
    # c_ref    : [bbw, D]    packed context block, original dtype
    # cm_ref   : [bbw, 1]    f32 context mask (binary), sublane orientation
    # rowid_ref: [bbw, 1]    int32 local batch id per packed context row (grid-constant)
    # o_ref    : [bbw, D]
    eps = 1e-12  # matches torch.nn.functional.normalize default eps
    qf = q_ref[...].astype(jnp.float32)
    cf = c_ref[...].astype(jnp.float32)
    d = qf.shape[-1]

    # Row-wise L2-norm scales (rsqrt -> EUP).  The 1/sqrt(D) similarity scale is folded
    # into the query-side scale; the context-side scale is folded into the s tile rows
    # after the matmul so the [bbw, D] context operand is never rewritten.
    q_scale = jnp.minimum(lax.rsqrt(jnp.sum(qf * qf, axis=-1, keepdims=True)),
                          1.0 / eps) * (1.0 / math.sqrt(d))
    c_scale = jnp.minimum(lax.rsqrt(jnp.sum(cf * cf, axis=-1, keepdims=True)),
                          1.0 / eps)

    q_bf = qf.astype(jnp.bfloat16)                 # raw query, reused by the attend matmul
    qn_bf = (qf * q_scale).astype(jnp.bfloat16)    # normalized similarity operand (small side)
    c_bf = cf.astype(jnp.bfloat16)                 # raw context; its scale goes on s rows

    # One packed similarity matmul for all bb batches in the block (f32 accumulation).
    s = lax.dot_general(
        c_bf, qn_bf,
        dimension_numbers=(((1,), (1,)), ((), ())),
        preferred_element_type=jnp.float32,
    )
    s = s * c_scale                                # [bbw, bbv] * [bbw, 1] sublane broadcast

    # Batch-local + query-mask selection in a single broadcast compare: columns from a
    # different batch (or with query_mask == 0, where colid == -1) never match.
    keep = rowid_ref[...] == colid_ref[...]        # [bbw,1] == [1,bbv] -> [bbw, bbv]

    # |s| <= 1/sqrt(D) after the norm scales, so the max over the FULL packed row is
    # numerically safe; the offset cancels in the normalization below.
    s = s - jnp.max(s, axis=-1, keepdims=True)
    e = jnp.where(keep, jnp.exp(s), 0.0)
    # Clamp so fully-masked rows (incl. zero-padded batches) give p == 0, never NaN.
    denom = jnp.maximum(jnp.sum(e, axis=-1, keepdims=True), 1e-20)
    p = e * pl.reciprocal(denom, approx=True)

    # Attend over the ORIGINAL (un-normalized) query, as in the PyTorch code.
    # Cross-batch contributions are exactly zero because p is block-diagonal.
    out = jnp.dot(p.astype(jnp.bfloat16), q_bf, preferred_element_type=jnp.float32)

    # Context mask only zeroes whole output rows (binary) -> cheap per-row scale.
    o_ref[...] = (out * cm_ref[...]).astype(o_ref.dtype)


def _choose_block_batch(B, n_verb, n_word):
    """Lane-/MXU-/generation-aware packing factor.

    Targets: bbv = bb*n_verb ~ 128 lanes (v5e) / 256 (v6e, v7x); bbw = bb*n_word <= ~256
    rows (bounds the bb^2-sized softmax tile -> EUP exp cost); prefer bb | B (skips the
    zero-pad pass); on v7x keep >= 2 grid steps per TensorCore so both cores pipeline.
    """
    try:
        kind = jax.devices()[0].device_kind.lower()
    except Exception:  # pragma: no cover - defensive
        kind = ""
    if "v7" in kind:
        lane_target, row_cap, min_steps = 256, 256, 4   # 2 TCs -> >=2 steps per core
    elif "v6" in kind:
        lane_target, row_cap, min_steps = 256, 256, 1
    else:                                               # v5e / unknown
        lane_target, row_cap, min_steps = 128, 256, 1

    bb = min(max(1, lane_target // max(n_verb, 1)),
             max(1, row_cap // max(n_word, 1)))
    bb = max(1, min(bb, B))

    # Prefer a divisor of B if it keeps at least half the packing (avoids padding pass).
    div = bb
    while div > 1 and B % div:
        div -= 1
    if 2 * div >= bb:
        bb = div

    # v7x: keep enough grid steps for per-core pipelining.
    while bb > 1 and pl.cdiv(B, bb) < min_steps:
        bb = max(1, bb // 2)
    return bb


def context_query_attention(query, query_mask, context, context_mask, *, block_batch=None):
    """Pallas forward of ContextQueryAttention (eval mode).

    query:        [bs, 1, n_cap, n_verb, D]
    query_mask:   [bs, 1, n_cap, n_verb]
    context:      [bs, 1, n_cap, n_word, D]
    context_mask: [bs, 1, n_cap, n_word]
    returns:      [bs, 1, n_cap, n_word, D]
    """
    bs, one, n_cap, n_verb, d = query.shape
    n_word = context.shape[-2]
    B = bs * one * n_cap

    bb = block_batch if block_batch is not None else _choose_block_batch(B, n_verb, n_word)
    nb = pl.cdiv(B, bb)
    b_pad = nb * bb
    bbv = bb * n_verb
    bbw = bb * n_word

    # Metadata-only reshapes; q/c stay in their original dtype (no wrapper astype pass).
    q3 = query.reshape(B, n_verb, d)
    c3 = context.reshape(B, n_word, d)
    qm2 = query_mask.reshape(B, n_verb)
    cm2 = context_mask.reshape(B, n_word).astype(jnp.float32)
    if b_pad != B:  # only pads when bb does not divide B (heuristic avoids this)
        pad = b_pad - B
        q3 = jnp.pad(q3, ((0, pad), (0, 0), (0, 0)))
        c3 = jnp.pad(c3, ((0, pad), (0, 0), (0, 0)))
        qm2 = jnp.pad(qm2, ((0, pad), (0, 0)))   # padded batches fully masked -> zero rows
        cm2 = jnp.pad(cm2, ((0, pad), (0, 0)))

    qk = q3.reshape(nb, bbv, d)
    ck = c3.reshape(nb, bbw, d)
    cmk = cm2.reshape(nb, bbw, 1)

    # Tiny id vectors replace both the query-mask input and the big block-diagonal mask:
    # rowid == colid  <=>  same batch within the packed block AND query position unmasked.
    q_batch = jnp.repeat(jnp.arange(bb, dtype=jnp.int32), n_verb)                   # [bbv]
    colid = jnp.where(qm2.reshape(nb, bbv) > 0, q_batch[None, :], -1).astype(jnp.int32)
    colid = colid.reshape(nb, 1, bbv)
    rowid = jnp.repeat(jnp.arange(bb, dtype=jnp.int32), n_word).reshape(1, bbw, 1)  # 1 KB

    out = pl.pallas_call(
        _cqa_kernel,
        out_shape=jax.ShapeDtypeStruct((nb, bbw, d), query.dtype),
        grid_spec=pltpu.PrefetchScalarGridSpec(
            num_scalar_prefetch=0,
            grid=(nb,),
            in_specs=[
                pl.BlockSpec((None, bbv, d), lambda i: (i, 0, 0)),   # packed query
                pl.BlockSpec((None, 1, bbv), lambda i: (i, 0, 0)),   # query col ids (lanes)
                pl.BlockSpec((None, bbw, d), lambda i: (i, 0, 0)),   # packed context
                pl.BlockSpec((None, bbw, 1), lambda i: (i, 0, 0)),   # context mask (rows)
                pl.BlockSpec((None, bbw, 1), lambda i: (0, 0, 0)),   # row ids (resident)
            ],
            out_specs=pl.BlockSpec((None, bbw, d), lambda i: (i, 0, 0)),
        ),
        compiler_params=pltpu.CompilerParams(
            dimension_semantics=("parallel",)),
    )(qk, colid, ck, cmk, rowid)

    out = out.reshape(b_pad, n_word, d)[:B]
    return out.reshape(bs, one, n_cap, n_word, d)


def _reference(query, query_mask, context, context_mask):
    """Plain-JAX f32 reference mirroring the PyTorch forward (eval mode)."""
    eps = 1e-12
    d = query.shape[-1]
    qn = query / jnp.maximum(jnp.linalg.norm(query, axis=-1, keepdims=True), eps)
    cn = context / jnp.maximum(jnp.linalg.norm(context, axis=-1, keepdims=True), eps)
    s_mask = context_mask[..., :, None] * query_mask[..., None, :]
    s = jnp.einsum("...wd,...vd->...wv", cn, qn) / math.sqrt(d)
    s = s - 1.0e10 * (1.0 - s_mask)
    p = jax.nn.softmax(s, axis=-1) * s_mask
    return jnp.einsum("...wv,...vd->...wd", p, query)


if __name__ == "__main__":
    key = jax.random.PRNGKey(0)
    # Small shapes; D=128 keeps output stores lane-dense (production TVQAPlus D=512).
    bs, n_cap, n_verb, n_word, d = 2, 2, 8, 8, 128

    k1, k2, k3, k4 = jax.random.split(key, 4)
    query = jax.random.normal(k1, (bs, 1, n_cap, n_verb, d), dtype=jnp.float32)
    context = jax.random.normal(k2, (bs, 1, n_cap, n_word, d), dtype=jnp.float32)
    # Binary masks (some positions padded out), deterministic.
    query_mask = (jax.random.uniform(k3, (bs, 1, n_cap, n_verb)) > 0.2).astype(jnp.float32)
    context_mask = (jax.random.uniform(k4, (bs, 1, n_cap, n_word)) > 0.2).astype(jnp.float32)

    out = context_query_attention(query, query_mask, context, context_mask)
    out = jax.block_until_ready(out)

    ref = _reference(query, query_mask, context, context_mask)
    assert out.shape == (bs, 1, n_cap, n_word, d)
    max_err = float(jnp.max(jnp.abs(out - ref)))
    # bf16 matmul operands + approx reciprocal -> loosened tolerance.
    assert jnp.allclose(out, ref, atol=2e-2, rtol=2e-2), max_err

    print("KERNEL_OK")
</pallas_src>

<mosaic_0001>
module attributes {stable_mosaic.version = 11 : i64} {
  func.func @_cqa_kernel(%arg0: i32, %arg1: memref<1x32x128xf32, #tpu.memory_space<vmem>>, %arg2: memref<1x1x32xi32, #tpu.memory_space<vmem>>, %arg3: memref<1x32x128xf32, #tpu.memory_space<vmem>>, %arg4: memref<1x32x1xf32, #tpu.memory_space<vmem>>, %arg5: memref<1x32x1xi32, #tpu.memory_space<vmem>>, %arg6: memref<1x32x128xf32, #tpu.memory_space<vmem>>) attributes {dimension_semantics = [#tpu.dimension_semantics<parallel>], iteration_bounds = array<i64: 1>, scalar_prefetch = 0 : i64, scratch_operands = 0 : i64, tpu.core_type = #tpu.core_type<tc>, window_params = [{transform_indices = @transform_0, window_bounds = array<i64: 1, 32, 128>}, {transform_indices = @transform_1, window_bounds = array<i64: 1, 1, 32>}, {transform_indices = @transform_2, window_bounds = array<i64: 1, 32, 128>}, {transform_indices = @transform_3, window_bounds = array<i64: 1, 32, 1>}, {pipeline_mode = #tpu.pipeline_mode<synchronous>, transform_indices = @transform_4, window_bounds = array<i64: 1, 32, 1>}, {transform_indices = @transform_5, window_bounds = array<i64: 1, 32, 128>}]} {
    %c0 = arith.constant 0 : index
    %c0_0 = arith.constant 0 : index
    %c0_1 = arith.constant 0 : index
    %0 = vector.load %arg1[%c0, %c0_0, %c0_1] : memref<1x32x128xf32, #tpu.memory_space<vmem>>, vector<1x32x128xf32>
    %1 = vector.shape_cast %0 : vector<1x32x128xf32> to vector<32x128xf32>
    %c0_2 = arith.constant 0 : index
    %c0_3 = arith.constant 0 : index
    %c0_4 = arith.constant 0 : index
    %2 = vector.load %arg3[%c0_2, %c0_3, %c0_4] : memref<1x32x128xf32, #tpu.memory_space<vmem>>, vector<1x32x128xf32>
    %3 = vector.shape_cast %2 : vector<1x32x128xf32> to vector<32x128xf32>
    %4 = arith.mulf %1, %1 : vector<32x128xf32>
    %cst = arith.constant dense<0.000000e+00> : vector<32xf32>
    %5 = vector.multi_reduction <add>, %4, %cst [1] : vector<32x128xf32> to vector<32xf32>
    %6 = vector.shape_cast %5 : vector<32xf32> to vector<32x1xf32>
    %7 = math.rsqrt %6 : vector<32x1xf32>
    %cst_5 = arith.constant 9.99999995E+11 : f32
    %8 = vector.broadcast %cst_5 : f32 to vector<32x1xf32>
    %9 = arith.minimumf %7, %8 : vector<32x1xf32>
    %cst_6 = arith.constant 0.0883883461 : f32
    %10 = vector.broadcast %cst_6 : f32 to vector<32x1xf32>
    %11 = arith.mulf %9, %10 : vector<32x1xf32>
    %12 = arith.mulf %3, %3 : vector<32x128xf32>
    %cst_7 = arith.constant dense<0.000000e+00> : vector<32xf32>
    %13 = vector.multi_reduction <add>, %12, %cst_7 [1] : vector<32x128xf32> to vector<32xf32>
    %14 = vector.shape_cast %13 : vector<32xf32> to vector<32x1xf32>
    %15 = math.rsqrt %14 : vector<32x1xf32>
    %cst_8 = arith.constant 9.99999995E+11 : f32
    %16 = vector.broadcast %cst_8 : f32 to vector<32x1xf32>
    %17 = arith.minimumf %15, %16 : vector<32x1xf32>
    %18 = arith.truncf %1 : vector<32x128xf32> to vector<32x128xbf16>
    %19 = vector.broadcast %11 : vector<32x1xf32> to vector<32x128xf32>
    %20 = arith.mulf %1, %19 : vector<32x128xf32>
    %21 = arith.truncf %20 : vector<32x128xf32> to vector<32x128xbf16>
    %22 = arith.truncf %3 : vector<32x128xf32> to vector<32x128xbf16>
    %cst_9 = arith.constant dense<0.000000e+00> : vector<32x32xf32>
    %23 = tpu.matmul %22, %21, %cst_9 {dimension_numbers = #tpu.dot_dimension_numbers<[1], [1], [0], [0], [0, 0, 1, 0], [], []>} : vector<32x128xbf16>, vector<32x128xbf16>, vector<32x32xf32> -> vector<32x32xf32>
    %24 = vector.broadcast %17 : vector<32x1xf32> to vector<32x32xf32>
    %25 = arith.mulf %23, %24 : vector<32x32xf32>
    %c0_10 = arith.constant 0 : index
    %c0_11 = arith.constant 0 : index
    %c0_12 = arith.constant 0 : index
    %26 = vector.load %arg5[%c0_10, %c0_11, %c0_12] : memref<1x32x1xi32, #tpu.memory_space<vmem>>, vector<1x32x1xi32>
    %27 = vector.shape_cast %26 : vector<1x32x1xi32> to vector<32x1xi32>
    %c0_13 = arith.constant 0 : index
    %c0_14 = arith.constant 0 : index
    %c0_15 = arith.constant 0 : index
    %28 = vector.load %arg2[%c0_13, %c0_14, %c0_15] : memref<1x1x32xi32, #tpu.memory_space<vmem>>, vector<1x1x32xi32>
    %29 = vector.shape_cast %28 : vector<1x1x32xi32> to vector<1x32xi32>
    %30 = vector.broadcast %27 : vector<32x1xi32> to vector<32x32xi32>
    %31 = vector.broadcast %29 : vector<1x32xi32> to vector<32x32xi32>
    %32 = arith.cmpi eq, %30, %31 : vector<32x32xi32>
    %cst_16 = arith.constant dense<0xFF800000> : vector<32xf32>
    %33 = vector.multi_reduction <maximumf>, %25, %cst_16 [1] : vector<32x32xf32> to vector<32xf32>
    %34 = vector.shape_cast %33 : vector<32xf32> to vector<32x1xf32>
    %35 = vector.broadcast %34 : vector<32x1xf32> to vector<32x32xf32>
    %36 = arith.subf %25, %35 : vector<32x32xf32>
    %37 = math.exp %36 : vector<32x32xf32>
    %cst_17 = arith.constant 0.000000e+00 : f32
    %38 = vector.broadcast %cst_17 : f32 to vector<32x32xf32>
    %39 = arith.select %32, %37, %38 : vector<32x32xi1>, vector<32x32xf32>
    %cst_18 = arith.constant dense<0.000000e+00> : vector<32xf32>
    %40 = vector.multi_reduction <add>, %39, %cst_18 [1] : vector<32x32xf32> to vector<32xf32>
    %41 = vector.shape_cast %40 : vector<32xf32> to vector<32x1xf32>
    %cst_19 = arith.constant 9.99999968E-21 : f32
    %42 = vector.broadcast %cst_19 : f32 to vector<32x1xf32>
    %43 = arith.maximumf %41, %42 : vector<32x1xf32>
    %44 = tpu.reciprocal %43 {approx = true} : vector<32x1xf32> -> vector<32x1xf32>
    %45 = vector.broadcast %44 : vector<32x1xf32> to vector<32x32xf32>
    %46 = arith.mulf %39, %45 : vector<32x32xf32>
    %47 = arith.truncf %46 : vector<32x32xf32> to vector<32x32xbf16>
    %cst_20 = arith.constant dense<0.000000e+00> : vector<32x128xf32>
    %48 = tpu.matmul %47, %18, %cst_20 {dimension_numbers = #tpu.dot_dimension_numbers<[1], [0], [0], [1], [0, 0, 1, 1], [], []>} : vector<32x32xbf16>, vector<32x128xbf16>, vector<32x128xf32> -> vector<32x128xf32>
    %c0_21 = arith.constant 0 : index
    %c0_22 = arith.constant 0 : index
    %c0_23 = arith.constant 0 : index
    %49 = vector.load %arg4[%c0_21, %c0_22, %c0_23] : memref<1x32x1xf32, #tpu.memory_space<vmem>>, vector<1x32x1xf32>
    %50 = vector.shape_cast %49 : vector<1x32x1xf32> to vector<32x1xf32>
    %51 = vector.broadcast %50 : vector<32x1xf32> to vector<32x128xf32>
    %52 = arith.mulf %48, %51 : vector<32x128xf32>
    %c0_24 = arith.constant 0 : index
    %c0_25 = arith.constant 0 : index
    %c0_26 = arith.constant 0 : index
    %53 = vector.load %arg6[%c0_24, %c0_25, %c0_26] : memref<1x32x128xf32, #tpu.memory_space<vmem>>, vector<1x32x128xf32>
    %54 = vector.shape_cast %53 : vector<1x32x128xf32> to vector<32x128xf32>
    %55 = vector.shape_cast %52 : vector<32x128xf32> to vector<1x32x128xf32>
    tpu.vector_store %arg6[%c0_24, %c0_25, %c0_26], %55 {strides = array<i32>} : memref<1x32x128xf32, #tpu.memory_space<vmem>>, vector<1x32x128xf32>,
    return
  }
  func.func @transform_0(%arg0: i32) -> (i32, i32, i32) {
    %c0_i32 = arith.constant 0 : i32
    %c0_i32_0 = arith.constant 0 : i32
    %c0_i32_1 = arith.constant 0 : i32
    return %arg0, %c0_i32, %c0_i32_0 : i32, i32, i32
  }
  func.func @transform_1(%arg0: i32) -> (i32, i32, i32) {
    %c0_i32 = arith.constant 0 : i32
    %c0_i32_0 = arith.constant 0 : i32
    %c0_i32_1 = arith.constant 0 : i32
    return %arg0, %c0_i32, %c0_i32_0 : i32, i32, i32
  }
  func.func @transform_2(%arg0: i32) -> (i32, i32, i32) {
    %c0_i32 = arith.constant 0 : i32
    %c0_i32_0 = arith.constant 0 : i32
    %c0_i32_1 = arith.constant 0 : i32
    return %arg0, %c0_i32, %c0_i32_0 : i32, i32, i32
  }
  func.func @transform_3(%arg0: i32) -> (i32, i32, i32) {
    %c0_i32 = arith.constant 0 : i32
    %c0_i32_0 = arith.constant 0 : i32
    %c0_i32_1 = arith.constant 0 : i32
    return %arg0, %c0_i32, %c0_i32_0 : i32, i32, i32
  }
  func.func @transform_4(%arg0: i32) -> (i32, i32, i32) {
    %c0_i32 = arith.constant 0 : i32
    %c0_i32_0 = arith.constant 0 : i32
    %c0_i32_1 = arith.constant 0 : i32
    %c0_i32_2 = arith.constant 0 : i32
    return %c0_i32, %c0_i32_0, %c0_i32_1 : i32, i32, i32
  }
  func.func @transform_5(%arg0: i32) -> (i32, i32, i32) {
    %c0_i32 = arith.constant 0 : i32
    %c0_i32_0 = arith.constant 0 : i32
    %c0_i32_1 = arith.constant 0 : i32
    return %arg0, %c0_i32, %c0_i32_0 : i32, i32, i32
  }
}

</mosaic_0001>

<llo_original>
// kernel: tpu_custom_call.1
$region0: #{tpu_custom_call.1}
  #allocation0 [shape = 'u32[]', space=smem, size = 0x4, offset = 0x4, fixed_abs, tag = 'smem constant byte address 0x4 - core index']
  #allocation1 [shape = 'u32[144,128]{1,0:T(1,128)}', space=vmem, size = 0x12000, scoped, tag = 'internal scratch']
  %s0 = inlined_call_operand.vmem [shape: f32[1,32,128], index: 0, kind: input, shape index: {}]
  %s1 = inlined_call_operand.vmem [shape: s32[1,1,32], index: 1, kind: input, shape index: {}]
  %s2 = inlined_call_operand.vmem [shape: f32[1,32,128], index: 2, kind: input, shape index: {}]
  %s3 = inlined_call_operand.vmem [shape: f32[1,32,1], index: 3, kind: input, shape index: {}]
  %s4 = inlined_call_operand.vmem [shape: s32[1,32,1], index: 4, kind: input, shape index: {}]
  %s5 = inlined_call_operand.hbm [shape: f32[1,32,128], index: 5, kind: output, shape index: {}]
  %s6 = sld [smem:[#allocation0]]
  $region30: #{tpu_custom_call.1} parent=0
    _
  %s8 = ssub.s32 1, %s6
  %s9 = scalar_select 0, %s8, %s6
  $region1: #{tpu_custom_call.1} parent=0
    #allocation2 [shape = 'u8[16384]{0}', space=vmem, size = 0x4000, scoped, tag = 'output window, operand 0, single buffered']
    #allocation3 [shape = 's32[1]{0}', space=sflag, size = 0x4, scoped, tag = 'scoped memory for tpu_custom_call.1']
    %10 = vsyncpa [#allocation3], 0
    // Predicated region
    $region2: #{tpu_custom_call.1} parent=1 // pred_check
      _
    $region3: #{tpu_custom_call.1} parent=1 // pred_check_branch
      %12 = sbr.rel (0) target = $region5
    $region4: #{tpu_custom_call.1} parent=1 // pred_region
      _
    $region5: #{tpu_custom_call.1} parent=1 // pred_fallthru
      _
    // Predicated region
    $region6: #{tpu_custom_call.1} parent=1 // pred_check
      _
    $region7: #{tpu_custom_call.1} parent=1 // pred_check_branch
      %14 = sbr.rel (0) target = $region9
    $region8: #{tpu_custom_call.1} parent=1 // pred_region
      _
    $region9: #{tpu_custom_call.1} parent=1 // pred_fallthru
      _
    // Predicated region
    $region10: #{tpu_custom_call.1} parent=1 // pred_check
      _
    $region11: #{tpu_custom_call.1} parent=1 // pred_check_branch
      %16 = sbr.rel (0) target = $region13
    $region12: #{tpu_custom_call.1} parent=1 // pred_region
      _
    $region13: #{tpu_custom_call.1} parent=1 // pred_fallthru
      _
    // Predicated region
    $region14: #{tpu_custom_call.1} parent=1 // pred_check
      _
    $region15: #{tpu_custom_call.1} parent=1 // pred_check_branch
      %18 = sbr.rel (0) target = $region17
    $region16: #{tpu_custom_call.1} parent=1 // pred_region
      _
    $region17: #{tpu_custom_call.1} parent=1 // pred_fallthru
      _
    // Predicated region
    $region18: #{tpu_custom_call.1} parent=1 // pred_check
      _
    $region19: #{tpu_custom_call.1} parent=1 // pred_check_branch
      %20 = sbr.rel (0) target = $region21
    $region20: #{tpu_custom_call.1} parent=1 // pred_region
      _
    $region21: #{tpu_custom_call.1} parent=1 // pred_fallthru
      _
    %v22 = vld [vmem:[%s0] sm:$0xff]
    %v23 = vld [vmem:[%s0 + $0x8] sm:$0xff]
    %v24 = vld [vmem:[%s0 + $0x10] sm:$0xff]
    %v25 = vld [vmem:[%s0 + $0x18] sm:$0xff]
    %v26 = vld [vmem:[%s2] sm:$0xff]
    %v27 = vld [vmem:[%s2 + $0x8] sm:$0xff]
    %v28 = vld [vmem:[%s2 + $0x10] sm:$0xff]
    %v29 = vld [vmem:[%s2 + $0x18] sm:$0xff]
    %v30 = vmul.f32 %v22, %v22
    %v31 = vmul.f32 %v23, %v23
    %v32 = vmul.f32 %v24, %v24
    %v33 = vmul.f32 %v25, %v25
    %34 = vadd.xlane.f32.xlu0 %v30
    %v35 = vpop.xlane.xlu0 %34
    %36 = vadd.xlane.f32.xlu0 %v31
    %v37 = vpop.xlane.xlu0 %36
    %38 = vadd.xlane.f32.xlu0 %v32
    %v39 = vpop.xlane.xlu0 %38
    %40 = vadd.xlane.f32.xlu0 %v33
    %v41 = vpop.xlane.xlu0 %40
    %v42 = vrsqrt.pop %v35
    %v43 = vrsqrt.pop %v37
    %v44 = vrsqrt.pop %v39
    %v45 = vrsqrt.pop %v41
    %v46 = vmin.f32 %v42, 1e+12
    %v47 = vmin.f32 %v43, 1e+12
    %v48 = vmin.f32 %v44, 1e+12
    %v49 = vmin.f32 %v45, 1e+12
    %v50 = vmul.f32 %v46, 0.088388346
    %v51 = vmul.f32 %v47, 0.088388346
    %v52 = vmul.f32 %v48, 0.088388346
    %v53 = vmul.f32 %v49, 0.088388346
    %v54 = vmul.f32 %v26, %v26
    %v55 = vmul.f32 %v27, %v27
    %v56 = vmul.f32 %v28, %v28
    %v57 = vmul.f32 %v29, %v29
    %58 = vadd.xlane.f32.xlu0 %v54
    %v59 = vpop.xlane.xlu0 %58
    %60 = vadd.xlane.f32.xlu0 %v55
    %v61 = vpop.xlane.xlu0 %60
    %62 = vadd.xlane.f32.xlu0 %v56
    %v63 = vpop.xlane.xlu0 %62
    %64 = vadd.xlane.f32.xlu0 %v57
    %v65 = vpop.xlane.xlu0 %64
    %v66 = vrsqrt.pop %v59
    %v67 = vrsqrt.pop %v61
    %v68 = vrsqrt.pop %v63
    %v69 = vrsqrt.pop %v65
    %v70 = vmin.f32 %v66, 1e+12
    %v71 = vmin.f32 %v67, 1e+12
    %v72 = vmin.f32 %v68, 1e+12
    %v73 = vmin.f32 %v69, 1e+12
    %v74 = vpack.c.bf16 %v23, %v22
    %v75 = vpack.c.bf16 %v25, %v24
    %v76 = vmul.f32 %v22, %v50
    %v77 = vmul.f32 %v23, %v51
    %v78 = vmul.f32 %v24, %v52
    %v79 = vmul.f32 %v25, %v53
    %v80 = vpack.c.bf16 %v77, %v76
    %v81 = vpack.c.bf16 %v79, %v78
    %v82 = vpack.c.bf16 %v27, %v26
    %v83 = vpack.c.bf16 %v29, %v28
    %84 = vmatprep.subr.bf16.mxu0 0
    %85 = vmatpush1.bf16.xpose.msra.mxu0 %v80
    %86 = vmatprep.subr.bf16.mxu0 0
    %87 = vmatpush1.bf16.xpose.msra.mxu0 %v81
    %88 = vmatprep.subr.bf16.mxu0 0
    %89 = vmatpush1.bf16.xpose.msra.mxu0 0
    %90 = vmatprep.subr.bf16.mxu0 0
    %91 = vmatpush1.bf16.xpose.msra.mxu0 0
    %92 = vmatprep.subr.bf16.mxu0 0
    %93 = vmatpush1.bf16.xpose.msra.mxu0 0
    %94 = vmatprep.subr.bf16.mxu0 0
    %95 = vmatpush1.bf16.xpose.msra.mxu0 0
    %96 = vmatprep.subr.bf16.mxu0 0
    %97 = vmatpush1.bf16.xpose.msra.mxu0 0
    %98 = vmatprep.subr.bf16.mxu0 0
    %99 = vmatpush1.bf16.xpose.msra.mxu0 0
    %100 = vmatprep.subr.bf16.mxu0 0
    %101 = vmatpush1.bf16.xpose.msra.mxu0 0
    %102 = vmatprep.subr.bf16.mxu0 0
    %103 = vmatpush1.bf16.xpose.msra.mxu0 0
    %104 = vmatprep.subr.bf16.mxu0 0
    %105 = vmatpush1.bf16.xpose.msra.mxu0 0
    %106 = vmatprep.subr.bf16.mxu0 0
    %107 = vmatpush1.bf16.xpose.msra.mxu0 0
    %108 = vmatprep.subr.bf16.mxu0 0
    %109 = vmatpush1.bf16.xpose.msra.mxu0 0
    %110 = vmatprep.subr.bf16.mxu0 0
    %111 = vmatpush1.bf16.xpose.msra.mxu0 0
    %112 = vmatprep.subr.bf16.mxu0 0
    %113 = vmatpush1.bf16.xpose.msra.mxu0 0
    %114 = vmatprep.subr.bf16.mxu0 0
    %115 = vmatpush1.bf16.xpose.msra.mxu0 0
    %116 = vmatprep.mubr.bf16.mxu0 0
    %117 = vmatmul.mubr.bf16.gmra.mrb[0].mxu0 %v82
    %v118 = vpop.f32.mrb[0].mxu0
    %v119 = vadd.f32 0.0, %v118
    %v120 = vpop.f32.mrb[0].mxu0
    %v121 = vpop.f32.mrb[0].mxu0
    %v122 = vadd.f32 0.0, %v121
    %v123 = vpop.f32.mrb[0].mxu0
    %124 = vmatprep.mubr.bf16.mxu0 0
    %125 = vmatmul.mubr.bf16.gmra.mrb[0].mxu0 %v83
    %v126 = vpop.f32.mrb[0].mxu0
    %v127 = vadd.f32 0.0, %v126
    %v128 = vpop.f32.mrb[0].mxu0
    %v129 = vpop.f32.mrb[0].mxu0
    %v130 = vadd.f32 0.0, %v129
    %v131 = vpop.f32.mrb[0].mxu0
    %132 = vdwg.mxu0
    %v133 = vmul.f32 %v119, %v70
    %v134 = vmul.f32 %v122, %v71
    %v135 = vmul.f32 %v127, %v72
    %v136 = vmul.f32 %v130, %v73
    %v137 = vld [vmem:[%s4] sm:$0xff]
    %v138 = vld [vmem:[%s4 + $0x8] sm:$0xff]
    %v139 = vld [vmem:[%s4 + $0x10] sm:$0xff]
    %v140 = vld [vmem:[%s4 + $0x18] sm:$0xff]
    %v141 = vld [vmem:[%s1] sm:$0x1]
    %142 = vset.pattern.permute.xlu0 0
    %143 = vperm.xlu0 %142, %v137
    %v144 = vpop.permute.xlu0 %143
    %145 = vset.pattern.permute.xlu0 0
    %146 = vperm.xlu0 %145, %v138
    %v147 = vpop.permute.xlu0 %146
    %148 = vset.pattern.permute.xlu0 0
    %149 = vperm.xlu0 %148, %v139
    %v150 = vpop.permute.xlu0 %149
    %151 = vset.pattern.permute.xlu0 0
    %152 = vperm.xlu0 %151, %v140
    %v153 = vpop.permute.xlu0 %152
    %v154 = vlaneseq
    %v155 = vshrl.u32 %v154, 7
    %v156 = vsub.s32 0, %v155
    %v157 = vrot.slane %v141, %v156
    %vm158 = vcmp.eq.s32.totalorder %v144, %v157
    %vm159 = vcmp.eq.s32.totalorder %v147, %v157
    %vm160 = vcmp.eq.s32.totalorder %v150, %v157
    %vm161 = vcmp.eq.s32.totalorder %v153, %v157
    %vm162 = vcmask 261120
    %v163 = vsel %vm162, %v133, -inf
    %164 = vmax.xlane.f32.xlu0 %v163
    %v165 = vpop.xlane.xlu0 %164
    %v166 = vsel %vm162, %v134, -inf
    %167 = vmax.xlane.f32.xlu0 %v166
    %v168 = vpop.xlane.xlu0 %167
    %v169 = vsel %vm162, %v135, -inf
    %170 = vmax.xlane.f32.xlu0 %v169
    %v171 = vpop.xlane.xlu0 %170
    %v172 = vsel %vm162, %v136, -inf
    %173 = vmax.xlane.f32.xlu0 %v172
    %v174 = vpop.xlane.xlu0 %173
    %v175 = vsub.f32 %v133, %v165
    %v176 = vsub.f32 %v134, %v168
    %v177 = vsub.f32 %v135, %v171
    %v178 = vsub.f32 %v136, %v174
    %v179 = vmul.f32 %v175, 1.442695
    %v180 = vpow.pop %v179
    %v181 = vmul.f32 %v176, 1.442695
    %v182 = vpow.pop %v181
    %v183 = vmul.f32 %v177, 1.442695
    %v184 = vpow.pop %v183
    %v185 = vmul.f32 %v178, 1.442695
    %v186 = vpow.pop %v185
    %v187 = vsel %vm158, %v180, 0.0
    %v188 = vsel %vm159, %v182, 0.0
    %v189 = vsel %vm160, %v184, 0.0
    %v190 = vsel %vm161, %v186, 0.0
    %v191 = vsel %vm162, %v187, 0.0
    %192 = vadd.xlane.f32.xlu0 %v191
    %v193 = vpop.xlane.xlu0 %192
    %v194 = vsel %vm162, %v188, 0.0
    %195 = vadd.xlane.f32.xlu0 %v194
    %v196 = vpop.xlane.xlu0 %195
    %v197 = vsel %vm162, %v189, 0.0
    %198 = vadd.xlane.f32.xlu0 %v197
    %v199 = vpop.xlane.xlu0 %198
    %v200 = vsel %vm162, %v190, 0.0
    %201 = vadd.xlane.f32.xlu0 %v200
    %v202 = vpop.xlane.xlu0 %201
    %v203 = vmax.f32 %v193, 1e-20
    %v204 = vmax.f32 %v196, 1e-20
    %v205 = vmax.f32 %v199, 1e-20
    %v206 = vmax.f32 %v202, 1e-20
    %v207 = vrcp.pop %v203
    %v208 = vrcp.pop %v204
    %v209 = vrcp.pop %v205
    %v210 = vrcp.pop %v206
    %v211 = vmul.f32 %v187, %v207
    %v212 = vmul.f32 %v188, %v208
    %v213 = vmul.f32 %v189, %v209
    %v214 = vmul.f32 %v190, %v210
    %v215 = vpack.c.bf16 %v212, %v211
    %v216 = vpack.c.bf16 %v214, %v213
    %v218 = vsel %vm162, %v215, 0
    %v221 = vsel %vm162, %v216, 0
    %223 = vmatprep.subr.bf16.mxu0 0
    %224 = vmatpush1.bf16.msra.mxu0 %v74
    %225 = vmatprep.subr.bf16.mxu0 0
    %226 = vmatpush1.bf16.msra.mxu0 %v75
    %227 = vmatprep.subr.bf16.mxu0 0
    %228 = vmatpush1.bf16.msra.mxu0 0
    %229 = vmatprep.subr.bf16.mxu0 0
    %230 = vmatpush1.bf16.msra.mxu0 0
    %231 = vmatprep.subr.bf16.mxu0 0
    %232 = vmatpush1.bf16.msra.mxu0 0
    %233 = vmatprep.subr.bf16.mxu0 0
    %234 = vmatpush1.bf16.msra.mxu0 0
    %235 = vmatprep.subr.bf16.mxu0 0
    %236 = vmatpush1.bf16.msra.mxu0 0
    %237 = vmatprep.subr.bf16.mxu0 0
    %238 = vmatpush1.bf16.msra.mxu0 0
    %239 = vmatprep.subr.bf16.mxu0 0
    %240 = vmatpush1.bf16.msra.mxu0 0
    %241 = vmatprep.subr.bf16.mxu0 0
    %242 = vmatpush1.bf16.msra.mxu0 0
    %243 = vmatprep.subr.bf16.mxu0 0
    %244 = vmatpush1.bf16.msra.mxu0 0
    %245 = vmatprep.subr.bf16.mxu0 0
    %246 = vmatpush1.bf16.msra.mxu0 0
    %247 = vmatprep.subr.bf16.mxu0 0
    %248 = vmatpush1.bf16.msra.mxu0 0
    %249 = vmatprep.subr.bf16.mxu0 0
    %250 = vmatpush1.bf16.msra.mxu0 0
    %251 = vmatprep.subr.bf16.mxu0 0
    %252 = vmatpush1.bf16.msra.mxu0 0
    %253 = vmatprep.subr.bf16.mxu0 0
    %254 = vmatpush1.bf16.msra.mxu0 0
    %255 = vmatprep.mubr.bf16.mxu0 0
    %256 = vmatmul.mubr.bf16.gmra.mrb[0].mxu0 %v218
    %v257 = vpop.f32.mrb[0].mxu0
    %v258 = vadd.f32 0.0, %v257
    %v259 = vpop.f32.mrb[0].mxu0
    %v260 = vpop.f32.mrb[0].mxu0
    %v261 = vadd.f32 0.0, %v260
    %v262 = vpop.f32.mrb[0].mxu0
    %263 = vmatprep.mubr.bf16.mxu0 0
    %264 = vmatmul.mubr.bf16.gmra.mrb[0].mxu0 %v221
    %v265 = vpop.f32.mrb[0].mxu0
    %v266 = vadd.f32 0.0, %v265
    %v267 = vpop.f32.mrb[0].mxu0
    %v268 = vpop.f32.mrb[0].mxu0
    %v269 = vadd.f32 0.0, %v268
    %v270 = vpop.f32.mrb[0].mxu0
    %271 = vdwg.mxu0
    %v272 = vld [vmem:[%s3] sm:$0xff]
    %v273 = vld [vmem:[%s3 + $0x8] sm:$0xff]
    %v274 = vld [vmem:[%s3 + $0x10] sm:$0xff]
    %v275 = vld [vmem:[%s3 + $0x18] sm:$0xff]
    %277 = vset.pattern.permute.xlu0 0
    %278 = vperm.xlu0 %277, %v272
    %v279 = vpop.permute.xlu0 %278
    %282 = vset.pattern.permute.xlu0 0
    %283 = vperm.xlu0 %282, %v273
    %v284 = vpop.permute.xlu0 %283
    %287 = vset.pattern.permute.xlu0 0
    %288 = vperm.xlu0 %287, %v274
    %v289 = vpop.permute.xlu0 %288
    %292 = vset.pattern.permute.xlu0 0
    %293 = vperm.xlu0 %292, %v275
    %v294 = vpop.permute.xlu0 %293
    %v296 = vmul.f32 %v258, %v279
    %v297 = vmul.f32 %v261, %v284
    %v298 = vmul.f32 %v266, %v289
    %v299 = vmul.f32 %v269, %v294
    %300 = vst [vmem:[#allocation2] sm:$0xff] %v296
    %301 = vst [vmem:[#allocation2 + $0x8] sm:$0xff] %v297
    %302 = vst [vmem:[#allocation2 + $0x10] sm:$0xff] %v298
    %303 = vst [vmem:[#allocation2 + $0x18] sm:$0xff] %v299
    // Predicated region
    $region22: #{tpu_custom_call.1} parent=1 // pred_check
      _
    $region23: #{tpu_custom_call.1} parent=1 // pred_check_branch
      %305 = sbr.rel (0) target = $region25
    $region24: #{tpu_custom_call.1} parent=1 // pred_region
      %s307 = ssub.s32 512, 512
      %308 = vsyncadd [#allocation3], %s307
      %s309 = sshll.u32 [#allocation2], 4
      %s310 = int_to_ptr.vmem [resolvable:$true] %s309
      %315 = dma.vmem_to_hbm [thread:$0]  %s310, 512, %s5, [#allocation3], 128, 128, 8
    $region25: #{tpu_custom_call.1} parent=1 // pred_fallthru
      _
    // Predicated region
    $region26: #{tpu_custom_call.1} parent=1 // pred_check
      _
    $region27: #{tpu_custom_call.1} parent=1 // pred_check_branch
      %317 = sbr.rel (0) target = $region29
    $region28: #{tpu_custom_call.1} parent=1 // pred_region
      %318 = dma.done [#allocation3], 512
    $region29: #{tpu_custom_call.1} parent=1 // pred_fallthru
      _
    %319 = vsyncpa [#allocation3], 1

</llo_original>
